<compile_context>
chip_gen: v6e
topology: v6e:2x2x1
jax: 0.10.0
libtpu: 0.0.40
codegen_flags: <defaults>
</compile_context>

<pallas_src>
import functools

import jax
import jax.numpy as jnp
from jax import lax
from jax.experimental import pallas as pl
from jax.experimental.pallas import tpu as pltpu


def _vmem_limit_bytes():
    """Generation-aware scoped-VMEM limit (~3/4 of physical capacity)."""
    try:
        cap = getattr(pltpu.get_tpu_info(), "vmem_capacity_bytes", None)
    except Exception:
        cap = None
    if not cap:
        cap = 64 * 1024 * 1024          # conservative fallback (v7x physical per-TC)
    return min(int(cap) * 3 // 4, 100 * 1024 * 1024)


_VMEM_LIMIT = _vmem_limit_bytes()


def _pick_tile(n, cap=512):
    """Largest sublane-friendly (multiple-of-8) tile <= cap that divides n."""
    for t in (512, 256, 128, 64, 32, 16, 8):
        if t <= cap and n % t == 0:
            return t
    return n  # full extent — always a legal block dim


def _pick_lane_tile(n, cap=1024):
    """Largest multiple-of-128 tile <= cap dividing n (lane dim), else full."""
    for t in (1024, 512, 256, 128):
        if t <= cap and n % t == 0:
            return t
    return n


def _pick_q_tile(n, batch):
    """Query tile; keep >= 2 parallel grid steps when possible (v7x: 2 TCs/chip)."""
    best = None
    for t in (256, 128, 64, 32, 16, 8):
        if n % t == 0:
            if best is None:
                best = t
            if batch * (n // t) >= 2:
                return t
    return best if best is not None else n


# ---------------------------------------------------------------------------
# Kernel 1: tiled linear projection   out = x @ wT (+ b)     (used for k, v)
#   x : (R, Cin) f32   wT : (Cin, Cout) bf16   b : (1, Cout) f32
#   bf16 MXU inputs, f32 accumulation, bf16 output. 2-D grid tiles rows and Cout
#   so the weight block stays within VMEM even for large C on v7x.
# ---------------------------------------------------------------------------
def _linear_kernel_bias(x_ref, wT_ref, b_ref, o_ref):
    x = x_ref[...].astype(jnp.bfloat16)                    # cast in-kernel (read f32 once)
    acc = jnp.dot(x, wT_ref[...], preferred_element_type=jnp.float32)
    o_ref[...] = (acc + b_ref[...]).astype(o_ref.dtype)


def _linear_kernel_nobias(x_ref, wT_ref, o_ref):
    x = x_ref[...].astype(jnp.bfloat16)
    o_ref[...] = jnp.dot(x, wT_ref[...],
                         preferred_element_type=jnp.float32).astype(o_ref.dtype)


def linear(x, wT, b=None, out_dtype=jnp.bfloat16):
    """x: (R, Cin) f32, wT: (Cin, Cout) bf16, b: (1, Cout) f32 or None."""
    R, Cin = x.shape
    Cout = wT.shape[1]
    tr = _pick_tile(R, cap=512)
    tc = _pick_lane_tile(Cout, cap=1024)
    in_specs = [
        pl.BlockSpec((tr, Cin), lambda i, j: (i, 0)),      # row tile (re-used across j)
        pl.BlockSpec((Cin, tc), lambda i, j: (0, j)),      # weight column slab
    ]
    if b is not None:
        in_specs.append(pl.BlockSpec((1, tc), lambda i, j: (0, j)))
        kernel, args = _linear_kernel_bias, (x, wT, b)
    else:
        kernel, args = _linear_kernel_nobias, (x, wT)
    return pl.pallas_call(
        kernel,
        out_shape=jax.ShapeDtypeStruct((R, Cout), out_dtype),
        grid=(R // tr, Cout // tc),
        in_specs=in_specs,
        out_specs=pl.BlockSpec((tr, tc), lambda i, j: (i, j)),   # lane-dense output
        compiler_params=pltpu.CompilerParams(
            dimension_semantics=("parallel", "parallel"),
            vmem_limit_bytes=_VMEM_LIMIT,
        ),
    )(*args)


# ---------------------------------------------------------------------------
# Kernel 2: fused q-projection + flash attention + output projection
#   q_raw : (B, N, C) f32     k_proj, v_proj : (B, M, C) bf16 (heads lane-packed)
#   wqT   : (C, C) bf16 (softmax scale pre-folded)      woT : (C, C) bf16
#   bq    : (1, C) f32 (optional)                        bo  : (1, C) f32
#   out   : (B, N, C) out_dtype (bf16 default, lane-dense blocks)
# grid = (B, N//tq, M//tk); kv axis innermost ("arbitrary") with online softmax,
# so K/V are streamed tiles (v7x-safe) instead of fully resident slabs.
# ---------------------------------------------------------------------------
def _flash_attn_proj_kernel(*refs, num_heads, head_dim, has_qbias):
    if has_qbias:
        (q_ref, k_ref, v_ref, wqT_ref, bq_ref, woT_ref, bo_ref,
         o_ref, qp_scr, ctx_scr, m_scr, l_scr) = refs
    else:
        (q_ref, k_ref, v_ref, wqT_ref, woT_ref, bo_ref,
         o_ref, qp_scr, ctx_scr, m_scr, l_scr) = refs
        bq_ref = None

    kv = pl.program_id(2)
    H, D = num_heads, head_dim

    @pl.when(kv == 0)
    def _init():
        # Fused q projection (once per query tile): (tq,C) x (C,C) on the MXU.
        qp = jnp.dot(q_ref[0].astype(jnp.bfloat16), wqT_ref[...],
                     preferred_element_type=jnp.float32)
        if bq_ref is not None:
            qp = qp + bq_ref[...]
        qp_scr[...] = qp.astype(jnp.bfloat16)
        ctx_scr[...] = jnp.zeros(ctx_scr.shape, ctx_scr.dtype)
        m_scr[...] = jnp.full(m_scr.shape, -jnp.inf, m_scr.dtype)
        l_scr[...] = jnp.zeros(l_scr.shape, l_scr.dtype)

    k = k_ref[0]                                           # (tk, C) bf16
    v = v_ref[0]                                           # (tk, C) bf16

    # Per-head online-softmax step. Heads are lane-dense along C, so every slice
    # below is a contiguous lane window (no strided sublane extraction).
    # TODO(synk): when D < 128 a grouped (batched over heads) score matmul could
    # raise lane occupancy further; lane-dense packing already avoids strided loads.
    for h in range(H):                                     # static unroll
        sl = slice(h * D, (h + 1) * D)
        qh = qp_scr[:, sl]                                 # (tq, D) bf16
        s = lax.dot_general(qh, k[:, sl], (((1,), (1,)), ((), ())),
                            preferred_element_type=jnp.float32)   # (tq, tk)
        m_prev = m_scr[:, h:h + 1]                         # (tq, 1)
        m_new = jnp.maximum(m_prev, jnp.max(s, axis=-1, keepdims=True))
        alpha = jnp.exp(m_prev - m_new)                    # (tq, 1) f32
        # bf16 exponent: EUP bf16 path on v6e/v7x (v5e upcasts internally).
        p = jnp.exp((s - m_new).astype(jnp.bfloat16))      # (tq, tk) bf16, unnormalized
        l_scr[:, h:h + 1] = alpha * l_scr[:, h:h + 1] + jnp.sum(
            p, axis=-1, keepdims=True, dtype=jnp.float32)
        pv = jnp.dot(p, v[:, sl], preferred_element_type=jnp.float32)  # (tq, D)
        ctx_scr[:, sl] = alpha * ctx_scr[:, sl] + pv
        m_scr[:, h:h + 1] = m_new

    @pl.when(kv == pl.num_programs(2) - 1)
    def _finalize():
        # Deferred softmax normalization per head (EUP reciprocal), lane-dense
        # context assembly, then ONE full-depth (tq,C)x(C,C) output projection.
        parts = []
        for h in range(H):
            inv = pl.reciprocal(l_scr[:, h:h + 1], approx=True)
            parts.append(ctx_scr[:, h * D:(h + 1) * D] * inv)
        ctx = jnp.concatenate(parts, axis=-1).astype(jnp.bfloat16)      # (tq, C)
        out = jnp.dot(ctx, woT_ref[...], preferred_element_type=jnp.float32)
        o_ref[0] = (out + bo_ref[...]).astype(o_ref.dtype)


def attention_fused(q, kp, vp, wqT, bq, woT, bo, *, num_heads,
                    out_dtype=jnp.bfloat16, kv_tile=None):
    """q: (B,N,C) f32, kp/vp: (B,M,C) bf16, wqT/woT: (C,C) bf16, bq/bo: (1,C) f32."""
    B, N, C = q.shape
    M = kp.shape[1]
    H = num_heads
    D = C // H

    tq = _pick_q_tile(N, B)
    if kv_tile is not None:
        assert M % kv_tile == 0 and (kv_tile % 8 == 0 or kv_tile == M)
        tk = kv_tile
    else:
        # Keep the double-buffered K/V blocks (~8*tk*C bytes) within ~1/3 of VMEM.
        tk_cap = max(128, (_VMEM_LIMIT // 3) // (8 * C))
        tk = _pick_tile(M, cap=min(512, tk_cap))

    kernel = functools.partial(_flash_attn_proj_kernel, num_heads=H, head_dim=D,
                               has_qbias=bq is not None)

    # Note: wqT / bq / woT / bo are constant across the whole grid; they could be
    # single-buffered (pipeline_mode=pl.Buffered(1)) to shave a little VMEM, but at
    # C*C bf16 they are small relative to the streamed K/V tiles.
    in_specs = [
        pl.BlockSpec((1, tq, C), lambda b, n, kv: (b, n, 0)),   # raw q (f32)
        pl.BlockSpec((1, tk, C), lambda b, n, kv: (b, kv, 0)),  # projected K (bf16)
        pl.BlockSpec((1, tk, C), lambda b, n, kv: (b, kv, 0)),  # projected V (bf16)
        pl.BlockSpec((C, C), lambda b, n, kv: (0, 0)),          # Wq^T * scale, resident
    ]
    args = [q, kp, vp, wqT]
    if bq is not None:
        in_specs.append(pl.BlockSpec((1, C), lambda b, n, kv: (0, 0)))
        args.append(bq)
    in_specs += [
        pl.BlockSpec((C, C), lambda b, n, kv: (0, 0)),          # Wo^T, resident
        pl.BlockSpec((1, C), lambda b, n, kv: (0, 0)),          # bo, resident
    ]
    args += [woT, bo]

    return pl.pallas_call(
        kernel,
        out_shape=jax.ShapeDtypeStruct((B, N, C), out_dtype),
        grid=(B, N // tq, M // tk),
        in_specs=in_specs,
        out_specs=pl.BlockSpec((1, tq, C), lambda b, n, kv: (b, n, 0)),  # lane-dense
        scratch_shapes=[
            pltpu.VMEM((tq, C), jnp.bfloat16),   # projected + scaled q
            pltpu.VMEM((tq, C), jnp.float32),    # lane-packed unnormalized context
            pltpu.VMEM((tq, H), jnp.float32),    # per-head running max
            pltpu.VMEM((tq, H), jnp.float32),    # per-head running denom
        ],
        compiler_params=pltpu.CompilerParams(
            dimension_semantics=("parallel", "parallel", "arbitrary"),
            vmem_limit_bytes=_VMEM_LIMIT,
        ),
    )(*args)


# ---------------------------------------------------------------------------
# Module wrapper (parameters initialized deterministically in-script)
# ---------------------------------------------------------------------------
class MultiHeadAttentionPallas:
    def __init__(self, dim, num_heads=8, qkv_bias=False, qk_scale=None, key=None):
        self.dim = dim
        self.num_heads = num_heads
        head_dim = dim // num_heads
        self.scale = qk_scale if qk_scale is not None else head_dim ** (-0.5)

        if key is None:
            key = jax.random.PRNGKey(0)
        ks = jax.random.split(key, 8)
        init = lambda k, shape: jax.random.normal(k, shape, jnp.float32) * 0.02
        # f32 master parameters, torch nn.Linear layout: weight = (out, in)
        self.wq = init(ks[0], (dim, dim))
        self.wk = init(ks[1], (dim, dim))
        self.wv = init(ks[2], (dim, dim))
        self.wo = init(ks[3], (dim, dim))
        if qkv_bias:
            self.bq = init(ks[4], (dim,))
            self.bk = init(ks[5], (dim,))
            self.bv = init(ks[6], (dim,))
        else:
            self.bq = self.bk = self.bv = None
        self.bo = init(ks[7], (dim,))

        # Cached kernel operands: transposed once, cast to bf16 for the MXU, softmax
        # scale folded into the q projection (weights + bias) -> free at runtime.
        self._wqT = (self.wq.T * self.scale).astype(jnp.bfloat16)
        self._wkT = self.wk.T.astype(jnp.bfloat16)
        self._wvT = self.wv.T.astype(jnp.bfloat16)
        self._woT = self.wo.T.astype(jnp.bfloat16)
        self._bq = None if self.bq is None else (self.bq * self.scale).reshape(1, dim).astype(jnp.float32)
        self._bk = None if self.bk is None else self.bk.reshape(1, dim).astype(jnp.float32)
        self._bv = None if self.bv is None else self.bv.reshape(1, dim).astype(jnp.float32)
        self._bo = self.bo.reshape(1, dim).astype(jnp.float32)

    def __call__(self, q, k, v, out_dtype=jnp.bfloat16, kv_tile=None):
        B, N, C = q.shape
        _, M, _ = k.shape

        # k / v projections (bf16 MXU inputs, f32 accumulation), heads stay lane-packed.
        # TODO(synk): when k is v (shared memory tensor) or q is k is v, fuse the
        # projections with a concatenated (C, 2C)/(C, 3C) weight so the activation is
        # read from HBM once.
        kp = linear(k.reshape(B * M, C), self._wkT, self._bk).reshape(B, M, C)
        vp = linear(v.reshape(B * M, C), self._wvT, self._bv).reshape(B, M, C)

        # Fused q-projection + flash attention + output projection
        # (attn_drop / proj_drop p=0.0 -> identity).
        return attention_fused(q, kp, vp, self._wqT, self._bq, self._woT, self._bo,
                               num_heads=self.num_heads, out_dtype=out_dtype,
                               kv_tile=kv_tile)


# ---------------------------------------------------------------------------
# Pure-JAX f32 reference (mirrors the PyTorch forward exactly)
# ---------------------------------------------------------------------------
def reference(mod, q, k, v):
    B, N, C = q.shape
    _, M, _ = k.shape
    H, D = mod.num_heads, C // mod.num_heads

    def lin(x, w, b):
        y = jnp.einsum("bnc,oc->bno", x, w)
        return y if b is None else y + b

    qp = lin(q, mod.wq, mod.bq).reshape(B, N, H, D).transpose(0, 2, 1, 3)
    kp = lin(k, mod.wk, mod.bk).reshape(B, M, H, D).transpose(0, 2, 1, 3)
    vp = lin(v, mod.wv, mod.bv).reshape(B, M, H, D).transpose(0, 2, 1, 3)
    attn = jnp.einsum("bhnd,bhmd->bhnm", qp, kp) * mod.scale
    attn = jax.nn.softmax(attn, axis=-1)
    x = jnp.einsum("bhnm,bhmd->bhnd", attn, vp).transpose(0, 2, 1, 3).reshape(B, N, C)
    return lin(x, mod.wo, mod.bo)


if __name__ == "__main__":
    B, N, M, C, H = 2, 8, 8, 32, 4   # head_dim = 8
    root = jax.random.PRNGKey(0)
    kq, kk, kv_, kp1, kk2, kv2, kp2 = jax.random.split(root, 7)

    q = jax.random.normal(kq, (B, N, C), jnp.float32)
    k = jax.random.normal(kk, (B, M, C), jnp.float32)
    v = jax.random.normal(kv_, (B, M, C), jnp.float32)

    # Check 1: no-bias path, single KV block.
    mod = MultiHeadAttentionPallas(dim=C, num_heads=H, qkv_bias=False, key=kp1)
    out = jax.block_until_ready(mod(q, k, v))
    ref = reference(mod, q, k, v)
    assert out.shape == (B, N, C)
    # bf16 MXU inputs / bf16 exp / approx reciprocal / bf16 output -> loose tolerance.
    assert jnp.allclose(out.astype(jnp.float32), ref, atol=1e-2, rtol=5e-2), \
        "mismatch vs reference (no-bias path)"

    # Check 2: qkv_bias path + multi-step KV tiling (exercises the online softmax).
    M2 = 16
    k2 = jax.random.normal(kk2, (B, M2, C), jnp.float32)
    v2 = jax.random.normal(kv2, (B, M2, C), jnp.float32)
    mod2 = MultiHeadAttentionPallas(dim=C, num_heads=H, qkv_bias=True, key=kp2)
    out2 = jax.block_until_ready(mod2(q, k2, v2, kv_tile=8))
    ref2 = reference(mod2, q, k2, v2)
    assert jnp.allclose(out2.astype(jnp.float32), ref2, atol=1e-2, rtol=5e-2), \
        "mismatch vs reference (bias + kv-tiled path)"

    print("KERNEL_OK")
</pallas_src>

<mosaic_0001>
module attributes {stable_mosaic.version = 11 : i64} {
  func.func @_linear_kernel_nobias(%arg0: i32, %arg1: i32, %arg2: memref<16x32xf32, #tpu.memory_space<vmem>>, %arg3: memref<32x32xbf16, #tpu.memory_space<vmem>>, %arg4: memref<16x32xbf16, #tpu.memory_space<vmem>>) attributes {dimension_semantics = [#tpu.dimension_semantics<parallel>, #tpu.dimension_semantics<parallel>], iteration_bounds = array<i64: 1, 1>, scalar_prefetch = 0 : i64, scratch_operands = 0 : i64, tpu.core_type = #tpu.core_type<tc>, window_params = [{transform_indices = @transform_0, window_bounds = array<i64: 16, 32>}, {transform_indices = @transform_1, window_bounds = array<i64: 32, 32>}, {transform_indices = @transform_2, window_bounds = array<i64: 16, 32>}]} {
    %c0 = arith.constant 0 : index
    %c0_0 = arith.constant 0 : index
    %0 = vector.load %arg2[%c0, %c0_0] : memref<16x32xf32, #tpu.memory_space<vmem>>, vector<16x32xf32>
    %1 = arith.truncf %0 : vector<16x32xf32> to vector<16x32xbf16>
    %c0_1 = arith.constant 0 : index
    %c0_2 = arith.constant 0 : index
    %2 = vector.load %arg3[%c0_1, %c0_2] : memref<32x32xbf16, #tpu.memory_space<vmem>>, vector<32x32xbf16>
    %cst = arith.constant dense<0.000000e+00> : vector<16x32xf32>
    %3 = tpu.matmul %1, %2, %cst {dimension_numbers = #tpu.dot_dimension_numbers<[1], [0], [0], [1], [0, 0, 1, 1], [], []>} : vector<16x32xbf16>, vector<32x32xbf16>, vector<16x32xf32> -> vector<16x32xf32>
    %4 = arith.truncf %3 : vector<16x32xf32> to vector<16x32xbf16>
    %c0_3 = arith.constant 0 : index
    %c0_4 = arith.constant 0 : index
    %5 = vector.load %arg4[%c0_3, %c0_4] : memref<16x32xbf16, #tpu.memory_space<vmem>>, vector<16x32xbf16>
    tpu.vector_store %arg4[%c0_3, %c0_4], %4 {strides = array<i32>} : memref<16x32xbf16, #tpu.memory_space<vmem>>, vector<16x32xbf16>,
    return
  }
  func.func @transform_0(%arg0: i32, %arg1: i32) -> (i32, i32) {
    %c0_i32 = arith.constant 0 : i32
    %c0_i32_0 = arith.constant 0 : i32
    return %arg0, %c0_i32 : i32, i32
  }
  func.func @transform_1(%arg0: i32, %arg1: i32) -> (i32, i32) {
    %c0_i32 = arith.constant 0 : i32
    %c0_i32_0 = arith.constant 0 : i32
    return %c0_i32, %arg1 : i32, i32
  }
  func.func @transform_2(%arg0: i32, %arg1: i32) -> (i32, i32) {
    %c0_i32 = arith.constant 0 : i32
    return %arg0, %arg1 : i32, i32
  }
}

</mosaic_0001>

<llo_original>
// kernel: tpu_custom_call.1
$region0: #{tpu_custom_call.1}
  #allocation0 [shape = 'u32[]', space=smem, size = 0x4, offset = 0x4, fixed_abs, tag = 'smem constant byte address 0x4 - core index']
  #allocation1 [shape = 'u32[144,128]{1,0:T(1,128)}', space=vmem, size = 0x12000, scoped, tag = 'internal scratch']
  %s0 = inlined_call_operand.hbm [shape: f32[16,32], index: 0, kind: input, shape index: {}]
  %s1 = inlined_call_operand.hbm [shape: bf16[32,32], index: 1, kind: input, shape index: {}]
  %s2 = inlined_call_operand.hbm [shape: bf16[16,32], index: 2, kind: output, shape index: {}]
  %s3 = sld [smem:[#allocation0]]
  $region26: #{tpu_custom_call.1} parent=0
    _
  %s5 = ssub.s32 1, %s3
  %s6 = scalar_select 0, %s5, %s3
  $region1: #{tpu_custom_call.1} parent=0
    #allocation2 [shape = 'u8[8192]{0}', space=vmem, size = 0x2000, scoped, tag = 'input window, operand 0, single buffered']
    #allocation3 [shape = 's32[1]{0}', space=sflag, size = 0x4, scoped, tag = 'scoped memory for tpu_custom_call.1']
    #allocation4 [shape = 's32[1]{0}', space=sflag, size = 0x4, scoped, tag = 'scoped memory for tpu_custom_call.1']
    #allocation5 [shape = 'u8[8192]{0}', space=vmem, size = 0x2000, scoped, tag = 'input window, operand 1, single buffered']
    #allocation6 [shape = 's32[1]{0}', space=sflag, size = 0x4, scoped, tag = 'scoped memory for tpu_custom_call.1']
    #allocation7 [shape = 'u8[4096]{0}', space=vmem, size = 0x1000, scoped, tag = 'output window, operand 0, single buffered']
    %7 = vsyncpa [#allocation3], 0
    %8 = vsyncpa [#allocation6], 0
    %9 = vsyncpa [#allocation4], 0
    // Predicated region
    $region2: #{tpu_custom_call.1} parent=1 // pred_check
      _
    $region3: #{tpu_custom_call.1} parent=1 // pred_check_branch
      %11 = sbr.rel (0) target = $region5
    $region4: #{tpu_custom_call.1} parent=1 // pred_region
      %s13 = ssub.s32 256, 256
      %14 = vsyncadd [#allocation3], %s13
      %s15 = sshll.u32 [#allocation2], 4
      %s16 = int_to_ptr.vmem [resolvable:$true] %s15
      %21 = dma.hbm_to_vmem [thread:$0]  %s0, 256, %s16, [#allocation3], 128, 128, 8
    $region5: #{tpu_custom_call.1} parent=1 // pred_fallthru
      _
    // Predicated region
    $region6: #{tpu_custom_call.1} parent=1 // pred_check
      _
    $region7: #{tpu_custom_call.1} parent=1 // pred_check_branch
      %23 = sbr.rel (0) target = $region9
    $region8: #{tpu_custom_call.1} parent=1 // pred_region
      %s25 = ssub.s32 256, 256
      %26 = vsyncadd [#allocation6], %s25
      %s27 = sshll.u32 [#allocation5], 4
      %s28 = int_to_ptr.vmem [resolvable:$true] %s27
      %33 = dma.hbm_to_vmem [thread:$0]  %s1, 256, %s28, [#allocation6], 64, 64, 4
    $region9: #{tpu_custom_call.1} parent=1 // pred_fallthru
      _
    // Predicated region
    $region10: #{tpu_custom_call.1} parent=1 // pred_check
      _
    $region11: #{tpu_custom_call.1} parent=1 // pred_check_branch
      %35 = sbr.rel (0) target = $region13
    $region12: #{tpu_custom_call.1} parent=1 // pred_region
      %36 = dma.done [#allocation3], 256
    $region13: #{tpu_custom_call.1} parent=1 // pred_fallthru
      _
    // Predicated region
    $region14: #{tpu_custom_call.1} parent=1 // pred_check
      _
    $region15: #{tpu_custom_call.1} parent=1 // pred_check_branch
      %38 = sbr.rel (0) target = $region17
    $region16: #{tpu_custom_call.1} parent=1 // pred_region
      %39 = dma.done [#allocation6], 256
    $region17: #{tpu_custom_call.1} parent=1 // pred_fallthru
      _
    %v41 = vld [vmem:[#allocation2] sm:$0xff]
    %v42 = vld [vmem:[#allocation2 + $0x8] sm:$0xff]
    %v43 = vpack.c.bf16 %v42, %v41
    %v44 = vld [vmem:[#allocation5] sm:$0xf]
    %v45 = vld [vmem:[#allocation5 + $0x4] sm:$0xf]
    %v46 = vld [vmem:[#allocation5 + $0x8] sm:$0xf]
    %v47 = vld [vmem:[#allocation5 + $0xc] sm:$0xf]
    %v52 = vunpack.c.l.b16 %v44
    %v53 = vunpack.c.l.b16 %v45
    %v54 = vunpack.c.l.b16 %v46
    %v55 = vunpack.c.l.b16 %v47
    %v56 = vpack.c.b16 %v53, %v52
    %v57 = vpack.c.b16 %v55, %v54
    %vm60 = vcmask 261120
    %v62 = vsel %vm60, %v43, 0
    %64 = vmatprep.subr.bf16.mxu0 0
    %65 = vmatpush1.bf16.msra.mxu0 0
    %66 = vmatprep.subr.bf16.mxu0 0
    %67 = vmatpush1.bf16.msra.mxu0 0
    %68 = vmatprep.subr.bf16.mxu0 0
    %69 = vmatpush1.bf16.msra.mxu0 0
    %70 = vmatprep.subr.bf16.mxu0 0
    %71 = vmatpush1.bf16.msra.mxu0 0
    %72 = vmatprep.subr.bf16.mxu0 0
    %73 = vmatpush1.bf16.msra.mxu0 0
    %74 = vmatprep.subr.bf16.mxu0 0
    %75 = vmatpush1.bf16.msra.mxu0 0
    %76 = vmatprep.subr.bf16.mxu0 0
    %77 = vmatpush1.bf16.msra.mxu0 %v57
    %78 = vmatprep.subr.bf16.mxu0 0
    %79 = vmatpush1.bf16.msra.mxu0 %v56
    %80 = vmatprep.subr.bf16.mxu0 0
    %81 = vmatpush2.bf16.msra.mxu0 0
    %82 = vmatprep.subr.bf16.mxu0 0
    %83 = vmatpush2.bf16.msra.mxu0 0
    %84 = vmatprep.subr.bf16.mxu0 0
    %85 = vmatpush2.bf16.msra.mxu0 0
    %86 = vmatprep.subr.bf16.mxu0 0
    %87 = vmatpush2.bf16.msra.mxu0 0
    %88 = vmatprep.subr.bf16.mxu0 0
    %89 = vmatpush2.bf16.msra.mxu0 0
    %90 = vmatprep.subr.bf16.mxu0 0
    %91 = vmatpush2.bf16.msra.mxu0 0
    %92 = vmatprep.subr.bf16.mxu0 0
    %93 = vmatpush2.bf16.msra.mxu0 0
    %94 = vmatprep.subr.bf16.mxu0 0
    %95 = vmatpush2.bf16.msra.mxu0 0
    %96 = vmatprep.mubr.bf16.mxu0 0
    %97 = vmatmul.mubr.bf16.gmra.mxu0 %v62
    %v98 = vpop.f32.mrf.mxu0
    %v99 = vadd.f32 0.0, %v98
    %v100 = vpop.f32.mrf.mxu0
    %v101 = vpop.f32.mrf.mxu0
    %v102 = vadd.f32 0.0, %v101
    %v103 = vpop.f32.mrf.mxu0
    %104 = vdwg.mxu0
    %v105 = vpack.c.bf16 %v102, %v99
    %v107 = vunpack.c.l.b16 %v105
    %v108 = vunpack.c.h.b16 %v105
    %v109 = vpack.c.b16 %v107, %v107
    %v110 = vpack.c.b16 %v108, %v108
    %vm113 = vcmask 257024
    %114 = vst.msk [vmem:[#allocation7] sm:$0xf] %vm113, %v109
    %115 = vst.msk [vmem:[#allocation7 + $0x4] sm:$0xf] %vm113, %v110
    // Predicated region
    $region18: #{tpu_custom_call.1} parent=1 // pred_check
      _
    $region19: #{tpu_custom_call.1} parent=1 // pred_check_branch
      %117 = sbr.rel (0) target = $region21
    $region20: #{tpu_custom_call.1} parent=1 // pred_region
      %s119 = ssub.s32 128, 128
      %120 = vsyncadd [#allocation4], %s119
      %s121 = sshll.u32 [#allocation7], 4
      %s122 = int_to_ptr.vmem [resolvable:$true] %s121
      %127 = dma.vmem_to_hbm [thread:$0]  %s122, 128, %s2, [#allocation4], 64, 64, 4
    $region21: #{tpu_custom_call.1} parent=1 // pred_fallthru
      _
    // Predicated region
    $region22: #{tpu_custom_call.1} parent=1 // pred_check
      _
    $region23: #{tpu_custom_call.1} parent=1 // pred_check_branch
      %129 = sbr.rel (0) target = $region25
    $region24: #{tpu_custom_call.1} parent=1 // pred_region
      %130 = dma.done [#allocation4], 128
    $region25: #{tpu_custom_call.1} parent=1 // pred_fallthru
      _
    %131 = vsyncpa [#allocation3], 1
    %132 = vsyncpa [#allocation6], 1
    %133 = vsyncpa [#allocation4], 1

</llo_original>
